<compile_context>
chip_gen: v7x
topology: tpu7x:2x2x1
jax: 0.10.0
libtpu: 0.0.40
codegen_flags: <defaults>
</compile_context>

<pallas_src>
import functools
import math

import jax
import jax.numpy as jnp
from jax import lax
from jax.experimental import pallas as pl
from jax.experimental.pallas import tpu as pltpu

LEAK = 0.01
EPS = 1e-5


def _leaky(v):
    return jnp.where(v > 0, v, LEAK * v)


def basic_block_kernel(xcol_ref, wx_ref, w2_ref, bias_ref, o_ref, *, planes, seg_len):
    # xcol_ref: (3*C_in, TN) bf16   im2col of x (prev | center | next stacked on channels),
    #                               TN = TB*seg_len lanes, TB whole samples per tile.
    # wx_ref:   (2*planes, 3*C_in) bf16  rows[:planes]  = conv1 weights (BN1 scale folded),
    #                                    rows[planes:]  = 1x1 shortcut (BN_sc folded), center tap only.
    # w2_ref:   (planes, 3*planes) bf16  conv2 weights (BN2 scale folded).
    # bias_ref: (3, planes, 1) f32       folded biases: [bn1, bn2, bn_sc].
    # o_ref:    (planes, TN) f32
    TN = o_ref.shape[1]

    # conv1 + shortcut in a single MXU push (f32 accumulate).
    res = jnp.dot(wx_ref[...], xcol_ref[...], preferred_element_type=jnp.float32)
    out1 = res[:planes, :] + bias_ref[0]          # BN1 (scale already in the weights)
    sc = res[planes:, :] + bias_ref[2]            # shortcut + BN_sc

    h = _leaky(out1)                              # LeakyReLU(0.01); dropout = identity (eval)

    # +-1 shifted copies of h for the k=3 conv2:
    #   h_prev[:, i] = h[:, i-1]  (0 at the start of each sample)
    #   h_next[:, i] = h[:, i+1]  (0 at the end   of each sample)
    # Built with static slice + concat (unambiguous), then masked at the per-sample
    # boundaries (tiles hold whole samples, so lane % seg_len is the in-sample position).
    lane = lax.broadcasted_iota(jnp.int32, (1, TN), 1)
    pos = lane % seg_len
    zero_col = jnp.zeros((h.shape[0], 1), h.dtype)
    h_prev = jnp.concatenate([zero_col, h[:, : TN - 1]], axis=1)
    h_next = jnp.concatenate([h[:, 1:], zero_col], axis=1)
    h_prev = jnp.where(pos == 0, 0.0, h_prev)
    h_next = jnp.where(pos == seg_len - 1, 0.0, h_next)

    hcol = jnp.concatenate([h_prev, h, h_next], axis=0).astype(w2_ref.dtype)  # (3*planes, TN)

    # conv2 as one im2col matmul, then BN2 bias, residual add, final LeakyReLU.
    out2 = jnp.dot(w2_ref[...], hcol, preferred_element_type=jnp.float32) + bias_ref[1]
    o_ref[...] = _leaky(out2 + sc)


def _fold_bn(gamma, beta, mean, var):
    s = gamma / jnp.sqrt(var + EPS)
    return s, beta - mean * s


def basic_block(x, params, stride=1):
    """x: (B, C_in, L) float32. Returns (B, planes, L) float32 (eval-mode BasicBlock)."""
    assert stride == 1  # TODO(synk): stride > 1 needs strided im2col / output positions.
    B, C_in, L = x.shape
    w1 = params["w1"]                                        # (planes, C_in, 3)
    planes = w1.shape[0]

    # ---- fold BatchNorm (eval) into weights / biases ----
    s1, b1 = _fold_bn(params["bn1_g"], params["bn1_b"], params["bn1_m"], params["bn1_v"])
    s2, b2 = _fold_bn(params["bn2_g"], params["bn2_b"], params["bn2_m"], params["bn2_v"])

    w1f = w1 * s1[:, None, None]
    w1_col = jnp.concatenate([w1f[:, :, 0], w1f[:, :, 1], w1f[:, :, 2]], axis=1)  # (planes, 3*C_in)

    if "wsc" in params:                                      # downsample: 1x1 conv + BN
        ssc, bsc = _fold_bn(params["bnsc_g"], params["bnsc_b"], params["bnsc_m"], params["bnsc_v"])
        wsc = params["wsc"][:, :, 0] * ssc[:, None]          # (planes, C_in)
    else:                                                    # identity shortcut
        assert C_in == planes
        wsc = jnp.eye(planes, dtype=jnp.float32)
        bsc = jnp.zeros((planes,), jnp.float32)
    zeros = jnp.zeros((planes, C_in), jnp.float32)
    wsc_col = jnp.concatenate([zeros, wsc, zeros], axis=1)   # (planes, 3*C_in) center tap only
    wx = jnp.concatenate([w1_col, wsc_col], axis=0).astype(jnp.bfloat16)      # (2*planes, 3*C_in)

    w2f = params["w2"] * s2[:, None, None]
    w2_col = jnp.concatenate([w2f[:, :, 0], w2f[:, :, 1], w2f[:, :, 2]],
                             axis=1).astype(jnp.bfloat16)    # (planes, 3*planes)

    biases = jnp.stack([b1, b2, bsc]).astype(jnp.float32)[:, :, None]          # (3, planes, 1)

    # ---- batch tiling: TB whole samples per grid step, lane width TN = TB*L (mult. of 128) ----
    g = math.gcd(L, 128)
    tb_unit = 128 // g                                       # smallest TB with TB*L % 128 == 0
    lanes_unit = tb_unit * L
    units_avail = -(-B // tb_unit)
    units = min(units_avail, max(1, 1024 // lanes_unit))     # target ~512-2048 lanes / tile
    if units_avail > 1:
        units = min(units, max(1, -(-units_avail // 2)))     # keep >=2 grid steps (v7x: 2 TCs)
    TB = tb_unit * units
    B_pad = -(-B // TB) * TB
    TN = TB * L
    num_tiles = B_pad // TB

    # ---- im2col on the XLA side (handles per-sample conv halos exactly) ----
    xp = jnp.pad(x.astype(jnp.float32), ((0, B_pad - B), (0, 0), (1, 1)))      # (B_pad, C_in, L+2)
    xcol = jnp.concatenate([xp[:, :, 0:L], xp[:, :, 1:L + 1], xp[:, :, 2:L + 2]], axis=1)
    xcol = jnp.transpose(xcol, (1, 0, 2)).reshape(3 * C_in, B_pad * L).astype(jnp.bfloat16)

    kernel = functools.partial(basic_block_kernel, planes=planes, seg_len=L)
    out = pl.pallas_call(
        kernel,
        out_shape=jax.ShapeDtypeStruct((planes, B_pad * L), jnp.float32),
        grid_spec=pltpu.PrefetchScalarGridSpec(
            num_scalar_prefetch=0,
            grid=(num_tiles,),
            in_specs=[
                pl.BlockSpec((3 * C_in, TN), lambda n: (0, n)),
                pl.BlockSpec((2 * planes, 3 * C_in), lambda n: (0, 0)),
                pl.BlockSpec((planes, 3 * planes), lambda n: (0, 0)),
                pl.BlockSpec((3, planes, 1), lambda n: (0, 0, 0)),
            ],
            out_specs=pl.BlockSpec((planes, TN), lambda n: (0, n)),
        ),
        compiler_params=pltpu.CompilerParams(dimension_semantics=("parallel",)),
    )(xcol, wx, w2_col, biases)

    return out.reshape(planes, B_pad, L).transpose(1, 0, 2)[:B]


def ref_basic_block(x, p):
    """Pure-JAX reference (eval-mode BasicBlock)."""
    dn = ("NCH", "OIH", "NCH")

    def conv(y, w, pad):
        return lax.conv_general_dilated(y, w, (1,), [(pad, pad)], dimension_numbers=dn)

    def bn(y, g, b, m, v):
        return ((y - m[None, :, None]) / jnp.sqrt(v[None, :, None] + EPS)
                * g[None, :, None] + b[None, :, None])

    out = conv(x, p["w1"], 1)
    out = jax.nn.leaky_relu(bn(out, p["bn1_g"], p["bn1_b"], p["bn1_m"], p["bn1_v"]), LEAK)
    out = bn(conv(out, p["w2"], 1), p["bn2_g"], p["bn2_b"], p["bn2_m"], p["bn2_v"])
    if "wsc" in p:
        sc = bn(conv(x, p["wsc"], 0), p["bnsc_g"], p["bnsc_b"], p["bnsc_m"], p["bnsc_v"])
    else:
        sc = x
    return jax.nn.leaky_relu(out + sc, LEAK)


def make_params(key, in_planes, planes, with_downsample):
    ks = jax.random.split(key, 16)
    p = {
        "w1": 0.2 * jax.random.normal(ks[0], (planes, in_planes, 3), jnp.float32),
        "w2": 0.2 * jax.random.normal(ks[1], (planes, planes, 3), jnp.float32),
        "bn1_g": 1.0 + 0.1 * jax.random.normal(ks[3], (planes,), jnp.float32),
        "bn1_b": 0.1 * jax.random.normal(ks[4], (planes,), jnp.float32),
        "bn1_m": 0.1 * jax.random.normal(ks[5], (planes,), jnp.float32),
        "bn1_v": jax.random.uniform(ks[6], (planes,), jnp.float32, 0.5, 1.5),
        "bn2_g": 1.0 + 0.1 * jax.random.normal(ks[7], (planes,), jnp.float32),
        "bn2_b": 0.1 * jax.random.normal(ks[8], (planes,), jnp.float32),
        "bn2_m": 0.1 * jax.random.normal(ks[9], (planes,), jnp.float32),
        "bn2_v": jax.random.uniform(ks[10], (planes,), jnp.float32, 0.5, 1.5),
    }
    if with_downsample:
        p["wsc"] = 0.2 * jax.random.normal(ks[2], (planes, in_planes, 1), jnp.float32)
        p["bnsc_g"] = 1.0 + 0.1 * jax.random.normal(ks[11], (planes,), jnp.float32)
        p["bnsc_b"] = 0.1 * jax.random.normal(ks[12], (planes,), jnp.float32)
        p["bnsc_m"] = 0.1 * jax.random.normal(ks[13], (planes,), jnp.float32)
        p["bnsc_v"] = jax.random.uniform(ks[14], (planes,), jnp.float32, 0.5, 1.5)
    return p


if __name__ == "__main__":
    key = jax.random.PRNGKey(0)
    kx1, kp1, kx2, kp2 = jax.random.split(key, 4)

    # Config 1: in_planes != planes -> 1x1-conv + BN shortcut path.
    B, C_IN, PLANES, L = 2, 4, 8, 16
    x1 = jax.random.normal(kx1, (B, C_IN, L), jnp.float32)
    p1 = make_params(kp1, C_IN, PLANES, with_downsample=True)
    out1 = jax.block_until_ready(basic_block(x1, p1, stride=1))
    ref1 = jax.block_until_ready(ref_basic_block(x1, p1))
    assert out1.shape == (B, PLANES, L), out1.shape
    err1 = float(jnp.max(jnp.abs(out1 - ref1)))
    assert jnp.allclose(out1, ref1, atol=5e-2, rtol=5e-2), err1  # bf16 matmul operands

    # Config 2: in_planes == planes, stride == 1 -> identity shortcut (matches PyTorch).
    x2 = jax.random.normal(kx2, (B, PLANES, L), jnp.float32)
    p2 = make_params(kp2, PLANES, PLANES, with_downsample=False)
    out2 = jax.block_until_ready(basic_block(x2, p2, stride=1))
    ref2 = jax.block_until_ready(ref_basic_block(x2, p2))
    err2 = float(jnp.max(jnp.abs(out2 - ref2)))
    assert jnp.allclose(out2, ref2, atol=5e-2, rtol=5e-2), err2

    print("KERNEL_OK")
</pallas_src>

<mosaic_0001>
module attributes {stable_mosaic.version = 11 : i64} {
  func.func @basic_block_kernel(%arg0: i32, %arg1: memref<12x128xbf16, #tpu.memory_space<vmem>>, %arg2: memref<16x12xbf16, #tpu.memory_space<vmem>>, %arg3: memref<8x24xbf16, #tpu.memory_space<vmem>>, %arg4: memref<3x8x1xf32, #tpu.memory_space<vmem>>, %arg5: memref<8x128xf32, #tpu.memory_space<vmem>>) attributes {dimension_semantics = [#tpu.dimension_semantics<parallel>], iteration_bounds = array<i64: 1>, scalar_prefetch = 0 : i64, scratch_operands = 0 : i64, tpu.core_type = #tpu.core_type<tc>, window_params = [{transform_indices = @transform_0, window_bounds = array<i64: 12, 128>}, {pipeline_mode = #tpu.pipeline_mode<synchronous>, transform_indices = @transform_1, window_bounds = array<i64: 16, 12>}, {pipeline_mode = #tpu.pipeline_mode<synchronous>, transform_indices = @transform_2, window_bounds = array<i64: 8, 24>}, {pipeline_mode = #tpu.pipeline_mode<synchronous>, transform_indices = @transform_3, window_bounds = array<i64: 3, 8, 1>}, {transform_indices = @transform_4, window_bounds = array<i64: 8, 128>}]} {
    %c0 = arith.constant 0 : index
    %c0_0 = arith.constant 0 : index
    %0 = vector.load %arg2[%c0, %c0_0] : memref<16x12xbf16, #tpu.memory_space<vmem>>, vector<16x12xbf16>
    %c0_1 = arith.constant 0 : index
    %c0_2 = arith.constant 0 : index
    %1 = vector.load %arg1[%c0_1, %c0_2] : memref<12x128xbf16, #tpu.memory_space<vmem>>, vector<12x128xbf16>
    %cst = arith.constant dense<0.000000e+00> : vector<16x128xf32>
    %2 = tpu.matmul %0, %1, %cst {dimension_numbers = #tpu.dot_dimension_numbers<[1], [0], [0], [1], [0, 0, 1, 1], [], []>} : vector<16x12xbf16>, vector<12x128xbf16>, vector<16x128xf32> -> vector<16x128xf32>
    %3 = vector.extract_strided_slice %2 {offsets = [0, 0], sizes = [8, 128], strides = [1, 1]} : vector<16x128xf32> to vector<8x128xf32>
    %c0_3 = arith.constant 0 : index
    %c0_4 = arith.constant 0 : index
    %c0_5 = arith.constant 0 : index
    %4 = vector.load %arg4[%c0_3, %c0_4, %c0_5] : memref<3x8x1xf32, #tpu.memory_space<vmem>>, vector<1x8x1xf32>
    %5 = vector.shape_cast %4 : vector<1x8x1xf32> to vector<8x1xf32>
    %6 = vector.broadcast %5 : vector<8x1xf32> to vector<8x128xf32>
    %7 = arith.addf %3, %6 : vector<8x128xf32>
    %8 = vector.extract_strided_slice %2 {offsets = [8, 0], sizes = [8, 128], strides = [1, 1]} : vector<16x128xf32> to vector<8x128xf32>
    %c2 = arith.constant 2 : index
    %c0_6 = arith.constant 0 : index
    %c0_7 = arith.constant 0 : index
    %9 = vector.load %arg4[%c2, %c0_6, %c0_7] : memref<3x8x1xf32, #tpu.memory_space<vmem>>, vector<1x8x1xf32>
    %10 = vector.shape_cast %9 : vector<1x8x1xf32> to vector<8x1xf32>
    %11 = vector.broadcast %10 : vector<8x1xf32> to vector<8x128xf32>
    %12 = arith.addf %8, %11 : vector<8x128xf32>
    %cst_8 = arith.constant 0.000000e+00 : f32
    %13 = vector.broadcast %cst_8 : f32 to vector<8x128xf32>
    %14 = arith.cmpf ogt, %7, %13 : vector<8x128xf32>
    %cst_9 = arith.constant 0.00999999977 : f32
    %15 = vector.broadcast %cst_9 : f32 to vector<8x128xf32>
    %16 = arith.mulf %15, %7 : vector<8x128xf32>
    %17 = arith.select %14, %7, %16 : vector<8x128xi1>, vector<8x128xf32>
    %18 = tpu.iota {dimensions = array<i32: 1>} : vector<1x128xi32>
    %c16_i32 = arith.constant 16 : i32
    %c0_i32 = arith.constant 0 : i32
    %19 = arith.cmpi eq, %c16_i32, %c0_i32 : i32
    %c1_i32 = arith.constant 1 : i32
    %20 = arith.select %19, %c1_i32, %c16_i32 : i32
    %21 = vector.broadcast %20 : i32 to vector<1x128xi32>
    %22 = arith.remsi %18, %21 : vector<1x128xi32>
    %c0_i32_10 = arith.constant 0 : i32
    %23 = vector.broadcast %c0_i32_10 : i32 to vector<1x128xi32>
    %24 = arith.cmpi ne, %22, %23 : vector<1x128xi32>
    %c0_i32_11 = arith.constant 0 : i32
    %25 = vector.broadcast %c0_i32_11 : i32 to vector<1x128xi32>
    %26 = arith.cmpi slt, %22, %25 : vector<1x128xi32>
    %c0_i32_12 = arith.constant 0 : i32
    %27 = arith.cmpi slt, %20, %c0_i32_12 : i32
    %28 = vector.broadcast %27 : i1 to vector<1x128xi1>
    %29 = vector.broadcast %28 : vector<1x128xi1> to vector<1x128xi1>
    %30 = arith.xori %26, %29 : vector<1x128xi1>
    %31 = arith.andi %30, %24 : vector<1x128xi1>
    %32 = vector.broadcast %20 : i32 to vector<1x128xi32>
    %33 = arith.addi %22, %32 : vector<1x128xi32>
    %34 = arith.select %31, %33, %22 : vector<1x128xi1>, vector<1x128xi32>
    %cst_13 = arith.constant 0.000000e+00 : f32
    %35 = vector.broadcast %cst_13 : f32 to vector<8x1xf32>
    %36 = vector.extract_strided_slice %17 {offsets = [0, 0], sizes = [8, 127], strides = [1, 1]} : vector<8x128xf32> to vector<8x127xf32>
    %37 = tpu.concatenate %35, %36 in 1 : vector<8x1xf32>, vector<8x127xf32> -> vector<8x128xf32>
    %38 = vector.extract_strided_slice %17 {offsets = [0, 1], sizes = [8, 127], strides = [1, 1]} : vector<8x128xf32> to vector<8x127xf32>
    %39 = tpu.concatenate %38, %35 in 1 : vector<8x127xf32>, vector<8x1xf32> -> vector<8x128xf32>
    %c0_i32_14 = arith.constant 0 : i32
    %40 = vector.broadcast %c0_i32_14 : i32 to vector<1x128xi32>
    %41 = arith.cmpi eq, %34, %40 : vector<1x128xi32>
    %cst_15 = arith.constant 0.000000e+00 : f32
    %42 = vector.shape_cast %41 : vector<1x128xi1> to vector<1x128xi1>
    %43 = vector.broadcast %42 : vector<1x128xi1> to vector<8x128xi1>
    %44 = vector.broadcast %cst_15 : f32 to vector<8x128xf32>
    %45 = arith.select %43, %44, %37 : vector<8x128xi1>, vector<8x128xf32>
    %c15_i32 = arith.constant 15 : i32
    %46 = vector.broadcast %c15_i32 : i32 to vector<1x128xi32>
    %47 = arith.cmpi eq, %34, %46 : vector<1x128xi32>
    %cst_16 = arith.constant 0.000000e+00 : f32
    %48 = vector.shape_cast %47 : vector<1x128xi1> to vector<1x128xi1>
    %49 = vector.broadcast %48 : vector<1x128xi1> to vector<8x128xi1>
    %50 = vector.broadcast %cst_16 : f32 to vector<8x128xf32>
    %51 = arith.select %49, %50, %39 : vector<8x128xi1>, vector<8x128xf32>
    %52 = tpu.concatenate %45, %17, %51 in 0 : vector<8x128xf32>, vector<8x128xf32>, vector<8x128xf32> -> vector<24x128xf32>
    %53 = arith.truncf %52 : vector<24x128xf32> to vector<24x128xbf16>
    %c0_17 = arith.constant 0 : index
    %c0_18 = arith.constant 0 : index
    %54 = vector.load %arg3[%c0_17, %c0_18] : memref<8x24xbf16, #tpu.memory_space<vmem>>, vector<8x24xbf16>
    %cst_19 = arith.constant dense<0.000000e+00> : vector<8x128xf32>
    %55 = tpu.matmul %54, %53, %cst_19 {dimension_numbers = #tpu.dot_dimension_numbers<[1], [0], [0], [1], [0, 0, 1, 1], [], []>} : vector<8x24xbf16>, vector<24x128xbf16>, vector<8x128xf32> -> vector<8x128xf32>
    %c1 = arith.constant 1 : index
    %c0_20 = arith.constant 0 : index
    %c0_21 = arith.constant 0 : index
    %56 = vector.load %arg4[%c1, %c0_20, %c0_21] : memref<3x8x1xf32, #tpu.memory_space<vmem>>, vector<1x8x1xf32>
    %57 = vector.shape_cast %56 : vector<1x8x1xf32> to vector<8x1xf32>
    %58 = vector.broadcast %57 : vector<8x1xf32> to vector<8x128xf32>
    %59 = arith.addf %55, %58 : vector<8x128xf32>
    %60 = arith.addf %59, %12 : vector<8x128xf32>
    %cst_22 = arith.constant 0.000000e+00 : f32
    %61 = vector.broadcast %cst_22 : f32 to vector<8x128xf32>
    %62 = arith.cmpf ogt, %60, %61 : vector<8x128xf32>
    %cst_23 = arith.constant 0.00999999977 : f32
    %63 = vector.broadcast %cst_23 : f32 to vector<8x128xf32>
    %64 = arith.mulf %63, %60 : vector<8x128xf32>
    %65 = arith.select %62, %60, %64 : vector<8x128xi1>, vector<8x128xf32>
    %c0_24 = arith.constant 0 : index
    %c0_25 = arith.constant 0 : index
    %66 = vector.load %arg5[%c0_24, %c0_25] : memref<8x128xf32, #tpu.memory_space<vmem>>, vector<8x128xf32>
    tpu.vector_store %arg5[%c0_24, %c0_25], %65 {strides = array<i32>} : memref<8x128xf32, #tpu.memory_space<vmem>>, vector<8x128xf32>,
    return
  }
  func.func @transform_0(%arg0: i32) -> (i32, i32) {
    %c0_i32 = arith.constant 0 : i32
    %c0_i32_0 = arith.constant 0 : i32
    return %c0_i32, %arg0 : i32, i32
  }
  func.func @transform_1(%arg0: i32) -> (i32, i32) {
    %c0_i32 = arith.constant 0 : i32
    %c0_i32_0 = arith.constant 0 : i32
    %c0_i32_1 = arith.constant 0 : i32
    return %c0_i32, %c0_i32_0 : i32, i32
  }
  func.func @transform_2(%arg0: i32) -> (i32, i32) {
    %c0_i32 = arith.constant 0 : i32
    %c0_i32_0 = arith.constant 0 : i32
    %c0_i32_1 = arith.constant 0 : i32
    return %c0_i32, %c0_i32_0 : i32, i32
  }
  func.func @transform_3(%arg0: i32) -> (i32, i32, i32) {
    %c0_i32 = arith.constant 0 : i32
    %c0_i32_0 = arith.constant 0 : i32
    %c0_i32_1 = arith.constant 0 : i32
    %c0_i32_2 = arith.constant 0 : i32
    return %c0_i32, %c0_i32_0, %c0_i32_1 : i32, i32, i32
  }
  func.func @transform_4(%arg0: i32) -> (i32, i32) {
    %c0_i32 = arith.constant 0 : i32
    %c0_i32_0 = arith.constant 0 : i32
    return %c0_i32, %arg0 : i32, i32
  }
}

</mosaic_0001>

<llo_original>
// kernel: tpu_custom_call.1
$region0: #{tpu_custom_call.1}
  #allocation0 [shape = 'u32[]', space=smem, size = 0x4, offset = 0x4, fixed_abs, tag = 'smem constant byte address 0x4 - core index']
  #allocation1 [shape = 'u32[144,128]{1,0:T(1,128)}', space=vmem, size = 0x12000, scoped, tag = 'internal scratch']
  %s0 = inlined_call_operand.vmem [shape: bf16[12,128], index: 0, kind: input, shape index: {}]
  %s1 = inlined_call_operand.vmem [shape: bf16[16,12], index: 1, kind: input, shape index: {}]
  %s2 = inlined_call_operand.vmem [shape: bf16[8,24], index: 2, kind: input, shape index: {}]
  %s3 = inlined_call_operand.vmem [shape: f32[3,8,1], index: 3, kind: input, shape index: {}]
  %s4 = inlined_call_operand.hbm [shape: f32[8,128], index: 4, kind: output, shape index: {}]
  %s5 = sld [smem:[#allocation0]]
  $region26: #{tpu_custom_call.1} parent=0
    _
  %s7 = ssub.s32 1, %s5
  %s8 = scalar_select 0, %s7, %s5
  $region1: #{tpu_custom_call.1} parent=0
    #allocation2 [shape = 'u8[4096]{0}', space=vmem, size = 0x1000, scoped, tag = 'output window, operand 0, single buffered']
    #allocation3 [shape = 's32[1]{0}', space=sflag, size = 0x4, scoped, tag = 'scoped memory for tpu_custom_call.1']
    %9 = vsyncpa [#allocation3], 0
    // Predicated region
    $region2: #{tpu_custom_call.1} parent=1 // pred_check
      _
    $region3: #{tpu_custom_call.1} parent=1 // pred_check_branch
      %11 = sbr.rel (0) target = $region5
    $region4: #{tpu_custom_call.1} parent=1 // pred_region
      _
    $region5: #{tpu_custom_call.1} parent=1 // pred_fallthru
      _
    // Predicated region
    $region6: #{tpu_custom_call.1} parent=1 // pred_check
      _
    $region7: #{tpu_custom_call.1} parent=1 // pred_check_branch
      %13 = sbr.rel (0) target = $region9
    $region8: #{tpu_custom_call.1} parent=1 // pred_region
      _
    $region9: #{tpu_custom_call.1} parent=1 // pred_fallthru
      _
    // Predicated region
    $region10: #{tpu_custom_call.1} parent=1 // pred_check
      _
    $region11: #{tpu_custom_call.1} parent=1 // pred_check_branch
      %15 = sbr.rel (0) target = $region13
    $region12: #{tpu_custom_call.1} parent=1 // pred_region
      _
    $region13: #{tpu_custom_call.1} parent=1 // pred_fallthru
      _
    // Predicated region
    $region14: #{tpu_custom_call.1} parent=1 // pred_check
      _
    $region15: #{tpu_custom_call.1} parent=1 // pred_check_branch
      %17 = sbr.rel (0) target = $region17
    $region16: #{tpu_custom_call.1} parent=1 // pred_region
      _
    $region17: #{tpu_custom_call.1} parent=1 // pred_fallthru
      _
    %v19 = vld [vmem:[%s1] sm:$0xf]
    %v20 = vld [vmem:[%s1 + $0x4] sm:$0xf]
    %v21 = vld [vmem:[%s0] sm:$0xf]
    %v22 = vld [vmem:[%s0 + $0x4] sm:$0x3]
    %v25 = vunpack.c.l.b16 %v19
    %v26 = vunpack.c.l.b16 %v20
    %v27 = vpack.c.b16 %v26, %v25
    %v30 = vunpack.c.l.b16 %v21
    %v31 = vunpack.c.l.b16 %v22
    %v32 = vpack.c.b16 %v31, %v30
    %vm33 = vcmask 97280
    %v35 = vsel %vm33, %v27, 0
    %vm37 = vcmask 1045504
    %v39 = vsel %vm37, %v32, 0
    %41 = vmatprep.subr.bf16.mxu0 0
    %42 = vmatpush1.bf16.msra.mxu0 %v39
    %43 = vmatprep.subr.bf16.mxu0 0
    %44 = vmatpush1.bf16.msra.mxu0 0
    %45 = vmatprep.subr.bf16.mxu0 0
    %46 = vmatpush1.bf16.msra.mxu0 0
    %47 = vmatprep.subr.bf16.mxu0 0
    %48 = vmatpush1.bf16.msra.mxu0 0
    %49 = vmatprep.subr.bf16.mxu0 0
    %50 = vmatpush1.bf16.msra.mxu0 0
    %51 = vmatprep.subr.bf16.mxu0 0
    %52 = vmatpush1.bf16.msra.mxu0 0
    %53 = vmatprep.subr.bf16.mxu0 0
    %54 = vmatpush1.bf16.msra.mxu0 0
    %55 = vmatprep.subr.bf16.mxu0 0
    %56 = vmatpush1.bf16.msra.mxu0 0
    %57 = vmatprep.subr.bf16.mxu0 0
    %58 = vmatpush1.bf16.msra.mxu0 0
    %59 = vmatprep.subr.bf16.mxu0 0
    %60 = vmatpush1.bf16.msra.mxu0 0
    %61 = vmatprep.subr.bf16.mxu0 0
    %62 = vmatpush1.bf16.msra.mxu0 0
    %63 = vmatprep.subr.bf16.mxu0 0
    %64 = vmatpush1.bf16.msra.mxu0 0
    %65 = vmatprep.subr.bf16.mxu0 0
    %66 = vmatpush1.bf16.msra.mxu0 0
    %67 = vmatprep.subr.bf16.mxu0 0
    %68 = vmatpush1.bf16.msra.mxu0 0
    %69 = vmatprep.subr.bf16.mxu0 0
    %70 = vmatpush1.bf16.msra.mxu0 0
    %71 = vmatprep.subr.bf16.mxu0 0
    %72 = vmatpush1.bf16.msra.mxu0 0
    %73 = vmatprep.mubr.bf16.mxu0 0
    %74 = vmatmul.mubr.bf16.gmra.mrb[0].mxu0 %v35
    %v75 = vpop.f32.mrb[0].mxu0
    %v76 = vadd.f32 0.0, %v75
    %v77 = vpop.f32.mrb[0].mxu0
    %v78 = vpop.f32.mrb[0].mxu0
    %v79 = vadd.f32 0.0, %v78
    %v80 = vpop.f32.mrb[0].mxu0
    %81 = vdwg.mxu0
    %v82 = vld [vmem:[%s3] sm:$0xff]
    %84 = vset.pattern.permute.xlu0 0
    %85 = vperm.xlu0 %84, %v82
    %v86 = vpop.permute.xlu0 %85
    %v88 = vadd.f32 %v76, %v86
    %s89 = scalar_lea.vmem %s3, 16
    %v90 = vld [vmem:[%s89] sm:$0xff]
    %92 = vset.pattern.permute.xlu0 0
    %93 = vperm.xlu0 %92, %v90
    %v94 = vpop.permute.xlu0 %93
    %v96 = vadd.f32 %v79, %v94
    %vm97 = vcmp.gt.f32.partialorder %v88, 0.0
    %v98 = vmul.f32 %v88, 0.01
    %v99 = vsel %vm97, %v88, %v98
    %v100 = vlaneseq
    %v101 = vand.u32 %v100, 127
    %vm102 = vcmp.lt.s32.totalorder %v101, 0
    %v103 = vsub.s32 0, %v101
    %v104 = vsel %vm102, %v103, %v101
    %v105 = vshrl.u32 %v104, 4
    %v106 = vand.u32 %v104, 15
    %v107 = vsub.s32 0, %v106
    %v108 = vsel %vm102, %v107, %v106
    %vm109 = vcmp.ne.s32.totalorder %v108, 0
    %vm110 = vcmp.lt.s32.totalorder %v108, 0
    %vm111 = vmand %vm110, %vm109
    %v112 = vadd.s32 %v108, 16
    %v113 = vsel %vm111, %v112, %v108
    %115 = vrot.lane.b32.xlu0 %v99, 1
    %v116 = vpop.permute.xlu0 %115
    %vm118 = vcmask 7168
    %v119 = vsel %vm118, 0.0, %v116
    %120 = vrot.lane.b32.xlu0 %v99, 127
    %v121 = vpop.permute.xlu0 %120
    %vm123 = vcmask 1039360
    %v124 = vsel %vm123, %v121, 0.0
    %vm125 = vcmp.eq.s32.totalorder %v113, 0
    %v126 = vsel %vm125, 1, 0
    %vm127 = vcmp.eq.s32.totalorder %v126, 1
    %v128 = vsel %vm127, 0.0, %v119
    %vm129 = vcmp.eq.s32.totalorder %v113, 15
    %v130 = vsel %vm129, 1, 0
    %vm131 = vcmp.eq.s32.totalorder %v130, 1
    %v132 = vsel %vm131, 0.0, %v124
    %v133 = vpack.c.bf16 %v99, %v128
    %v134 = vpack.c.bf16 %v132, %v132
    %v135 = vld [vmem:[%s2] sm:$0xf]
    %s136 = scalar_lea.vmem %s3, 8
    %v137 = vld [vmem:[%s136] sm:$0xff]
    %139 = vset.pattern.permute.xlu0 0
    %140 = vperm.xlu0 %139, %v137
    %v141 = vpop.permute.xlu0 %140
    %vm143 = vcmask 195584
    %v145 = vsel %vm143, %v135, 0
    %vm147 = vcmask 1043456
    %v149 = vsel %vm147, %v134, 0
    %151 = vmatprep.subr.bf16.mxu0 0
    %152 = vmatpush1.bf16.msra.mxu0 %v133
    %153 = vmatprep.subr.bf16.mxu0 0
    %154 = vmatpush1.bf16.msra.mxu0 %v149
    %155 = vmatprep.subr.bf16.mxu0 0
    %156 = vmatpush1.bf16.msra.mxu0 0
    %157 = vmatprep.subr.bf16.mxu0 0
    %158 = vmatpush1.bf16.msra.mxu0 0
    %159 = vmatprep.subr.bf16.mxu0 0
    %160 = vmatpush1.bf16.msra.mxu0 0
    %161 = vmatprep.subr.bf16.mxu0 0
    %162 = vmatpush1.bf16.msra.mxu0 0
    %163 = vmatprep.subr.bf16.mxu0 0
    %164 = vmatpush1.bf16.msra.mxu0 0
    %165 = vmatprep.subr.bf16.mxu0 0
    %166 = vmatpush1.bf16.msra.mxu0 0
    %167 = vmatprep.subr.bf16.mxu0 0
    %168 = vmatpush1.bf16.msra.mxu0 0
    %169 = vmatprep.subr.bf16.mxu0 0
    %170 = vmatpush1.bf16.msra.mxu0 0
    %171 = vmatprep.subr.bf16.mxu0 0
    %172 = vmatpush1.bf16.msra.mxu0 0
    %173 = vmatprep.subr.bf16.mxu0 0
    %174 = vmatpush1.bf16.msra.mxu0 0
    %175 = vmatprep.subr.bf16.mxu0 0
    %176 = vmatpush1.bf16.msra.mxu0 0
    %177 = vmatprep.subr.bf16.mxu0 0
    %178 = vmatpush1.bf16.msra.mxu0 0
    %179 = vmatprep.subr.bf16.mxu0 0
    %180 = vmatpush1.bf16.msra.mxu0 0
    %181 = vmatprep.subr.bf16.mxu0 0
    %182 = vmatpush1.bf16.msra.mxu0 0
    %183 = vmatprep.mubr.bf16.mxu0 0
    %184 = vmatmul.mubr.bf16.gmra.mrb[0].mxu0 %v145
    %v185 = vpop.f32.mrb[0].mxu0
    %v186 = vadd.f32 %v141, %v185
    %v187 = vpop.f32.mrb[0].mxu0
    %v188 = vpop.f32.mrb[0].mxu0
    %v189 = vpop.f32.mrb[0].mxu0
    %190 = vdwg.mxu0
    %v191 = vadd.f32 %v186, %v96
    %vm192 = vcmp.gt.f32.partialorder %v191, 0.0
    %v193 = vmul.f32 %v191, 0.01
    %v194 = vsel %vm192, %v191, %v193
    %195 = vst [vmem:[#allocation2] sm:$0xff] %v194
    // Predicated region
    $region18: #{tpu_custom_call.1} parent=1 // pred_check
      _
    $region19: #{tpu_custom_call.1} parent=1 // pred_check_branch
      %197 = sbr.rel (0) target = $region21
    $region20: #{tpu_custom_call.1} parent=1 // pred_region
      %s199 = ssub.s32 128, 128
      %200 = vsyncadd [#allocation3], %s199
      %s202 = sshll.u32 [#allocation2], 4
      %s203 = int_to_ptr.vmem [resolvable:$true] %s202
      %205 = dma.vmem_to_hbm [thread:$0]  %s203, 128, %s4, [#allocation3]
    $region21: #{tpu_custom_call.1} parent=1 // pred_fallthru
      _
    // Predicated region
    $region22: #{tpu_custom_call.1} parent=1 // pred_check
      _
    $region23: #{tpu_custom_call.1} parent=1 // pred_check_branch
      %207 = sbr.rel (0) target = $region25
    $region24: #{tpu_custom_call.1} parent=1 // pred_region
      %208 = dma.done [#allocation3], 128
    $region25: #{tpu_custom_call.1} parent=1 // pred_fallthru
      _
    %209 = vsyncpa [#allocation3], 1

</llo_original>
